<compile_context>
chip_gen: v5e
topology: v5e:2x2
jax: 0.10.0
libtpu: 0.0.40
codegen_flags: <defaults>
</compile_context>

<pallas_src>
import functools

import jax
import jax.numpy as jnp
from jax.experimental import pallas as pl
from jax.experimental.pallas import tpu as pltpu


# ---------------------------------------------------------------------------
# Kernel
# ---------------------------------------------------------------------------
def _twin_dqn_kernel(o_ref, b1_ref, w128_ref, w256_ref, vec_ref, q_ref, *, d_in):
    f32 = jnp.float32
    bf16 = jnp.bfloat16

    o = o_ref[...]       # (TB, D_in)  f32
    b1 = b1_ref[...]     # (TB, 1)     f32

    # --- static views into the packed weight slabs (zero runtime cost) ---
    we1 = w128_ref[0:d_in, :]                   # (D_in,128) bf16  enc layer 1
    w2f = w128_ref[d_in:d_in + 256, :]          # (256,128)  bf16  fused [we2; wb2; 0]
    wout = w128_ref[d_in + 256:d_in + 512, :]   # (256,128)  bf16  block-diag [wv1b | wv2b]
    wv = w256_ref[...]                          # (128,256)  bf16  fused [wv1a | wv2a]

    be1 = vec_ref[0:1, 0:128]     # enc layer-1 bias
    wb1p = vec_ref[1:2, 0:128]    # b1_fc layer-1 weight row (padded 64->128 with zeros)
    bb1p = vec_ref[2:3, 0:128]    # b1_fc layer-1 bias       (padded 64->128 with zeros)
    b2f = vec_ref[3:4, 0:128]     # be2 + bb2
    bvf = vec_ref[4:5, :]         # [bv1a | bv2a]                (1,256)
    bout = vec_ref[5:6, 0:128]    # [bv1b | bv2b | zeros]        (1,128)

    # --- enc layer 1: Linear(D_in,128) + ReLU ---
    h = jnp.maximum(
        jnp.dot(o.astype(bf16), we1, preferred_element_type=f32) + be1, 0.0)      # (TB,128)

    # --- b1_fc layer 1: Linear(1,64) + ReLU, zero-padded to 128 lanes (f32 VPU) ---
    hb = jnp.maximum(b1 * wb1p + bb1p, 0.0)                                        # (TB,128)

    # --- fused second layer: z = [h | hb] @ [we2; wb2; 0] + (be2 + bb2) ---
    cat = jnp.concatenate([h, hb], axis=1).astype(bf16)                            # (TB,256)
    z = jnp.dot(cat, w2f, preferred_element_type=f32) + b2f                        # (TB,128)

    # --- fused value-head first layers (N = 256 = one MXU tile on v6e/v7x) ---
    h12 = jnp.maximum(
        jnp.dot(z.astype(bf16), wv, preferred_element_type=f32) + bvf, 0.0)        # (TB,256)

    # --- fused block-diagonal output layer -> one lane-dense (TB,128) store ---
    q_ref[...] = jnp.dot(h12.astype(bf16), wout, preferred_element_type=f32) + bout


# ---------------------------------------------------------------------------
# Wrapper: pack weights once, then stream batch tiles through the kernel
# ---------------------------------------------------------------------------
def pack_params(params, input_size, action_dim):
    """Pack all 16 weight/bias tensors into 3 HBM slabs (built once)."""
    f32, bf16 = jnp.float32, jnp.bfloat16
    A = action_dim
    assert 2 * A <= 128

    # 128-lane bf16 weight slab: [we1 ; we2 ; wb2(pad) ; wout_blockdiag]
    wb2_pad = jnp.concatenate([params["wb2"], jnp.zeros((64, 128), f32)], axis=0)      # (128,128)
    w2_fused = jnp.concatenate([params["we2"], wb2_pad], axis=0)                       # (256,128)
    wout = jnp.zeros((256, 128), f32)
    wout = wout.at[0:128, 0:A].set(params["wv1b"])
    wout = wout.at[128:256, A:2 * A].set(params["wv2b"])
    slab128 = jnp.concatenate([params["we1"], w2_fused, wout], axis=0).astype(bf16)

    # 256-lane bf16 weight slab: fused value-head first layer [wv1a | wv2a]
    slab256 = jnp.concatenate([params["wv1a"], params["wv2a"]], axis=1).astype(bf16)   # (128,256)

    # f32 vector slab: every (1,N) bias / broadcast row packed into one (8,256) tile
    def row(v):  # (1,k<=256) -> (1,256)
        pad = 256 - v.shape[1]
        return v if pad == 0 else jnp.concatenate([v, jnp.zeros((1, pad), f32)], axis=1)

    bout = jnp.zeros((1, 128), f32)
    bout = bout.at[0, 0:A].set(params["bv1b"][0])
    bout = bout.at[0, A:2 * A].set(params["bv2b"][0])
    vec = jnp.concatenate([
        row(params["be1"]),
        row(params["wb1"]),
        row(params["bb1"]),
        row(params["be2"] + params["bb2"]),
        jnp.concatenate([params["bv1a"], params["bv2a"]], axis=1),
        row(bout),
        jnp.zeros((2, 256), f32),
    ], axis=0)                                                                         # (8,256)
    return slab128, slab256, vec


def twin_dqn_forward(o, b1, packed, *, input_size, action_dim, block_b=8):
    slab128, slab256, vec = packed
    B = o.shape[0]
    A = action_dim
    TB = block_b
    B_pad = ((B + TB - 1) // TB) * TB
    if B_pad != B:
        o = jnp.pad(o, ((0, B_pad - B), (0, 0)))
        b1 = jnp.pad(b1, ((0, B_pad - B), (0, 0)))
    r128 = slab128.shape[0]

    kernel = functools.partial(_twin_dqn_kernel, d_in=input_size)

    out = pl.pallas_call(
        kernel,
        out_shape=jax.ShapeDtypeStruct((B_pad, 128), jnp.float32),
        grid_spec=pltpu.PrefetchScalarGridSpec(
            num_scalar_prefetch=0,
            grid=(B_pad // TB,),
            in_specs=[
                pl.BlockSpec((TB, input_size), lambda i: (i, 0)),   # o tile: streams
                pl.BlockSpec((TB, 1), lambda i: (i, 0)),            # b1 tile: streams
                pl.BlockSpec((r128, 128), lambda i: (0, 0)),        # weights: VMEM-resident
                pl.BlockSpec((128, 256), lambda i: (0, 0)),
                pl.BlockSpec((8, 256), lambda i: (0, 0)),
            ],
            out_specs=pl.BlockSpec((TB, 128), lambda i: (i, 0)),
        ),
        compiler_params=pltpu.CompilerParams(
            dimension_semantics=("parallel",)),   # v7x: both TensorCores split the batch
    )(o, b1, slab128, slab256, vec)

    q1 = out[:B, 0:A]
    q2 = out[:B, A:2 * A]
    return q1, q2


# ---------------------------------------------------------------------------
# Parameter init + reference
# ---------------------------------------------------------------------------
def init_params(key, input_size, action_dim):
    """Deterministic synthetic init (uniform, roughly matching nn.Linear scale).
    Weights are (in_dim, out_dim) so y = x @ W + b (transpose of torch layout)."""
    def linear(k, d_in, d_out):
        kw, kb = jax.random.split(k)
        bound = 1.0 / jnp.sqrt(jnp.float32(d_in))
        w = jax.random.uniform(kw, (d_in, d_out), jnp.float32, -bound, bound)
        b = jax.random.uniform(kb, (1, d_out), jnp.float32, -bound, bound)
        return w, b

    keys = jax.random.split(key, 8)
    p = {}
    p["we1"], p["be1"] = linear(keys[0], input_size, 128)
    p["we2"], p["be2"] = linear(keys[1], 128, 128)
    p["wb1"], p["bb1"] = linear(keys[2], 1, 64)
    p["wb2"], p["bb2"] = linear(keys[3], 64, 128)
    p["wv1a"], p["bv1a"] = linear(keys[4], 128, 128)
    p["wv1b"], p["bv1b"] = linear(keys[5], 128, action_dim)
    p["wv2a"], p["bv2a"] = linear(keys[6], 128, 128)
    p["wv2b"], p["bv2b"] = linear(keys[7], 128, action_dim)
    return p


def reference_forward(o, b1, p):
    """Pure-JAX reference of TwinDQN.forward using the same bf16-weight /
    bf16-activation / f32-accumulate numerics as the kernel."""
    bf16, f32 = jnp.bfloat16, jnp.float32

    def mm(x, w):
        return jnp.dot(x.astype(bf16), w.astype(bf16), preferred_element_type=f32)

    h = jnp.maximum(mm(o, p["we1"]) + p["be1"], 0.0)
    z_o = mm(h, p["we2"]) + p["be2"]
    hb = jnp.maximum(b1 * p["wb1"] + p["bb1"], 0.0)
    z_b1 = mm(hb, p["wb2"]) + p["bb2"]
    z = z_o + z_b1
    q1 = mm(jnp.maximum(mm(z, p["wv1a"]) + p["bv1a"], 0.0), p["wv1b"]) + p["bv1b"]
    q2 = mm(jnp.maximum(mm(z, p["wv2a"]) + p["bv2a"], 0.0), p["wv2b"]) + p["bv2b"]
    return q1, q2


# ---------------------------------------------------------------------------
if __name__ == "__main__":
    # train_configs: agent_total_state_dim=8, max_num_other_agents_in_range=3
    #   -> input_size = 8 * (3 + 1) = 32 ; action_dim = 4
    BATCH = 16
    AGENT_STATE_DIM = 8
    MAX_OTHER_AGENTS = 3
    ACTION_DIM = 4
    INPUT_SIZE = AGENT_STATE_DIM * (MAX_OTHER_AGENTS + 1)

    key = jax.random.PRNGKey(0)
    k_o, k_b1, k_p = jax.random.split(key, 3)
    o = jax.random.normal(k_o, (BATCH, INPUT_SIZE), jnp.float32)
    b1 = jax.random.normal(k_b1, (BATCH, 1), jnp.float32)
    params = init_params(k_p, INPUT_SIZE, ACTION_DIM)
    packed = pack_params(params, INPUT_SIZE, ACTION_DIM)

    q1, q2 = twin_dqn_forward(o, b1, packed,
                              input_size=INPUT_SIZE, action_dim=ACTION_DIM)
    q1 = jax.block_until_ready(q1)
    q2 = jax.block_until_ready(q2)

    r1, r2 = reference_forward(o, b1, params)
    assert q1.shape == (BATCH, ACTION_DIM) and q2.shape == (BATCH, ACTION_DIM)
    assert jnp.allclose(q1, r1, atol=2e-3, rtol=2e-3)
    assert jnp.allclose(q2, r2, atol=2e-3, rtol=2e-3)

    print("KERNEL_OK")
</pallas_src>

<mosaic_0001>
module attributes {stable_mosaic.version = 11 : i64} {
  func.func @_twin_dqn_kernel(%arg0: i32, %arg1: memref<8x32xf32, #tpu.memory_space<vmem>>, %arg2: memref<8x1xf32, #tpu.memory_space<vmem>>, %arg3: memref<544x128xbf16, #tpu.memory_space<vmem>>, %arg4: memref<128x256xbf16, #tpu.memory_space<vmem>>, %arg5: memref<8x256xf32, #tpu.memory_space<vmem>>, %arg6: memref<8x128xf32, #tpu.memory_space<vmem>>) attributes {dimension_semantics = [#tpu.dimension_semantics<parallel>], iteration_bounds = array<i64: 2>, scalar_prefetch = 0 : i64, scratch_operands = 0 : i64, tpu.core_type = #tpu.core_type<tc>, window_params = [{transform_indices = @transform_0, window_bounds = array<i64: 8, 32>}, {transform_indices = @transform_1, window_bounds = array<i64: 8, 1>}, {pipeline_mode = #tpu.pipeline_mode<synchronous>, transform_indices = @transform_2, window_bounds = array<i64: 544, 128>}, {pipeline_mode = #tpu.pipeline_mode<synchronous>, transform_indices = @transform_3, window_bounds = array<i64: 128, 256>}, {pipeline_mode = #tpu.pipeline_mode<synchronous>, transform_indices = @transform_4, window_bounds = array<i64: 8, 256>}, {transform_indices = @transform_5, window_bounds = array<i64: 8, 128>}]} {
    %c0 = arith.constant 0 : index
    %c0_0 = arith.constant 0 : index
    %0 = vector.load %arg1[%c0, %c0_0] : memref<8x32xf32, #tpu.memory_space<vmem>>, vector<8x32xf32>
    %c0_1 = arith.constant 0 : index
    %c0_2 = arith.constant 0 : index
    %1 = vector.load %arg2[%c0_1, %c0_2] : memref<8x1xf32, #tpu.memory_space<vmem>>, vector<8x1xf32>
    %c0_3 = arith.constant 0 : index
    %c0_4 = arith.constant 0 : index
    %2 = vector.load %arg3[%c0_3, %c0_4] : memref<544x128xbf16, #tpu.memory_space<vmem>>, vector<32x128xbf16>
    %c32 = arith.constant 32 : index
    %c0_5 = arith.constant 0 : index
    %3 = vector.load %arg3[%c32, %c0_5] : memref<544x128xbf16, #tpu.memory_space<vmem>>, vector<256x128xbf16>
    %c288 = arith.constant 288 : index
    %c0_6 = arith.constant 0 : index
    %4 = vector.load %arg3[%c288, %c0_6] : memref<544x128xbf16, #tpu.memory_space<vmem>>, vector<256x128xbf16>
    %c0_7 = arith.constant 0 : index
    %c0_8 = arith.constant 0 : index
    %5 = vector.load %arg4[%c0_7, %c0_8] : memref<128x256xbf16, #tpu.memory_space<vmem>>, vector<128x256xbf16>
    %c0_9 = arith.constant 0 : index
    %c0_10 = arith.constant 0 : index
    %6 = vector.load %arg5[%c0_9, %c0_10] : memref<8x256xf32, #tpu.memory_space<vmem>>, vector<1x128xf32>
    %c1 = arith.constant 1 : index
    %c0_11 = arith.constant 0 : index
    %7 = vector.load %arg5[%c1, %c0_11] : memref<8x256xf32, #tpu.memory_space<vmem>>, vector<1x128xf32>
    %c2 = arith.constant 2 : index
    %c0_12 = arith.constant 0 : index
    %8 = vector.load %arg5[%c2, %c0_12] : memref<8x256xf32, #tpu.memory_space<vmem>>, vector<1x128xf32>
    %c3 = arith.constant 3 : index
    %c0_13 = arith.constant 0 : index
    %9 = vector.load %arg5[%c3, %c0_13] : memref<8x256xf32, #tpu.memory_space<vmem>>, vector<1x128xf32>
    %c4 = arith.constant 4 : index
    %c0_14 = arith.constant 0 : index
    %10 = vector.load %arg5[%c4, %c0_14] : memref<8x256xf32, #tpu.memory_space<vmem>>, vector<1x256xf32>
    %c5 = arith.constant 5 : index
    %c0_15 = arith.constant 0 : index
    %11 = vector.load %arg5[%c5, %c0_15] : memref<8x256xf32, #tpu.memory_space<vmem>>, vector<1x128xf32>
    %12 = arith.truncf %0 : vector<8x32xf32> to vector<8x32xbf16>
    %cst = arith.constant dense<0.000000e+00> : vector<8x128xf32>
    %13 = tpu.matmul %12, %2, %cst {dimension_numbers = #tpu.dot_dimension_numbers<[1], [0], [0], [1], [0, 0, 1, 1], [], []>} : vector<8x32xbf16>, vector<32x128xbf16>, vector<8x128xf32> -> vector<8x128xf32>
    %14 = vector.broadcast %6 : vector<1x128xf32> to vector<8x128xf32>
    %15 = arith.addf %13, %14 : vector<8x128xf32>
    %cst_16 = arith.constant 0.000000e+00 : f32
    %16 = vector.broadcast %cst_16 : f32 to vector<8x128xf32>
    %17 = arith.maximumf %15, %16 : vector<8x128xf32>
    %18 = vector.broadcast %1 : vector<8x1xf32> to vector<8x128xf32>
    %19 = vector.broadcast %7 : vector<1x128xf32> to vector<8x128xf32>
    %20 = arith.mulf %18, %19 : vector<8x128xf32>
    %21 = vector.broadcast %8 : vector<1x128xf32> to vector<8x128xf32>
    %22 = arith.addf %20, %21 : vector<8x128xf32>
    %cst_17 = arith.constant 0.000000e+00 : f32
    %23 = vector.broadcast %cst_17 : f32 to vector<8x128xf32>
    %24 = arith.maximumf %22, %23 : vector<8x128xf32>
    %25 = tpu.concatenate %17, %24 in 1 : vector<8x128xf32>, vector<8x128xf32> -> vector<8x256xf32>
    %26 = arith.truncf %25 : vector<8x256xf32> to vector<8x256xbf16>
    %cst_18 = arith.constant dense<0.000000e+00> : vector<8x128xf32>
    %27 = tpu.matmul %26, %3, %cst_18 {dimension_numbers = #tpu.dot_dimension_numbers<[1], [0], [0], [1], [0, 0, 1, 1], [], []>} : vector<8x256xbf16>, vector<256x128xbf16>, vector<8x128xf32> -> vector<8x128xf32>
    %28 = vector.broadcast %9 : vector<1x128xf32> to vector<8x128xf32>
    %29 = arith.addf %27, %28 : vector<8x128xf32>
    %30 = arith.truncf %29 : vector<8x128xf32> to vector<8x128xbf16>
    %cst_19 = arith.constant dense<0.000000e+00> : vector<8x256xf32>
    %31 = tpu.matmul %30, %5, %cst_19 {dimension_numbers = #tpu.dot_dimension_numbers<[1], [0], [0], [1], [0, 0, 1, 1], [], []>} : vector<8x128xbf16>, vector<128x256xbf16>, vector<8x256xf32> -> vector<8x256xf32>
    %32 = vector.broadcast %10 : vector<1x256xf32> to vector<8x256xf32>
    %33 = arith.addf %31, %32 : vector<8x256xf32>
    %cst_20 = arith.constant 0.000000e+00 : f32
    %34 = vector.broadcast %cst_20 : f32 to vector<8x256xf32>
    %35 = arith.maximumf %33, %34 : vector<8x256xf32>
    %36 = arith.truncf %35 : vector<8x256xf32> to vector<8x256xbf16>
    %cst_21 = arith.constant dense<0.000000e+00> : vector<8x128xf32>
    %37 = tpu.matmul %36, %4, %cst_21 {dimension_numbers = #tpu.dot_dimension_numbers<[1], [0], [0], [1], [0, 0, 1, 1], [], []>} : vector<8x256xbf16>, vector<256x128xbf16>, vector<8x128xf32> -> vector<8x128xf32>
    %38 = vector.broadcast %11 : vector<1x128xf32> to vector<8x128xf32>
    %39 = arith.addf %37, %38 : vector<8x128xf32>
    %c0_22 = arith.constant 0 : index
    %c0_23 = arith.constant 0 : index
    %40 = vector.load %arg6[%c0_22, %c0_23] : memref<8x128xf32, #tpu.memory_space<vmem>>, vector<8x128xf32>
    tpu.vector_store %arg6[%c0_22, %c0_23], %39 {strides = array<i32>} : memref<8x128xf32, #tpu.memory_space<vmem>>, vector<8x128xf32>,
    return
  }
  func.func @transform_0(%arg0: i32) -> (i32, i32) {
    %c0_i32 = arith.constant 0 : i32
    %c0_i32_0 = arith.constant 0 : i32
    return %arg0, %c0_i32 : i32, i32
  }
  func.func @transform_1(%arg0: i32) -> (i32, i32) {
    %c0_i32 = arith.constant 0 : i32
    %c0_i32_0 = arith.constant 0 : i32
    return %arg0, %c0_i32 : i32, i32
  }
  func.func @transform_2(%arg0: i32) -> (i32, i32) {
    %c0_i32 = arith.constant 0 : i32
    %c0_i32_0 = arith.constant 0 : i32
    %c0_i32_1 = arith.constant 0 : i32
    return %c0_i32, %c0_i32_0 : i32, i32
  }
  func.func @transform_3(%arg0: i32) -> (i32, i32) {
    %c0_i32 = arith.constant 0 : i32
    %c0_i32_0 = arith.constant 0 : i32
    %c0_i32_1 = arith.constant 0 : i32
    return %c0_i32, %c0_i32_0 : i32, i32
  }
  func.func @transform_4(%arg0: i32) -> (i32, i32) {
    %c0_i32 = arith.constant 0 : i32
    %c0_i32_0 = arith.constant 0 : i32
    %c0_i32_1 = arith.constant 0 : i32
    return %c0_i32, %c0_i32_0 : i32, i32
  }
  func.func @transform_5(%arg0: i32) -> (i32, i32) {
    %c0_i32 = arith.constant 0 : i32
    %c0_i32_0 = arith.constant 0 : i32
    return %arg0, %c0_i32 : i32, i32
  }
}

</mosaic_0001>

<llo_original>
// kernel: tpu_custom_call.1
$region0: #{tpu_custom_call.1}
  #allocation0 [shape = 'u32[]', space=smem, size = 0x4, offset = 0x4, fixed_abs, tag = 'smem constant byte address 0x4 - core index']
  #allocation1 [shape = 'u32[72,128]{1,0:T(1,128)}', space=vmem, size = 0x9000, scoped, tag = 'internal scratch']
  %s0 = inlined_call_operand.vmem [shape: f32[16,32], index: 0, kind: input, shape index: {}]
  %s1 = inlined_call_operand.vmem [shape: f32[16,1], index: 1, kind: input, shape index: {}]
  %s2 = inlined_call_operand.hbm [shape: bf16[544,128], index: 2, kind: input, shape index: {}]
  %s3 = inlined_call_operand.hbm [shape: bf16[128,256], index: 3, kind: input, shape index: {}]
  %s4 = inlined_call_operand.hbm [shape: f32[8,256], index: 4, kind: input, shape index: {}]
  %s5 = inlined_call_operand.hbm [shape: f32[16,128], index: 5, kind: output, shape index: {}]
  %s6 = sld [smem:[#allocation0]]
  $region65: #{tpu_custom_call.1} parent=0
    _
  %s8 = ssub.s32 1, %s6
  %s9 = scalar_select 0, %s8, %s6
  $region1: #{tpu_custom_call.1} parent=0
    #allocation2 [shape = 'u8[139264]{0}', space=vmem, size = 0x22000, scoped, tag = 'input window, operand 2, single buffered']
    #allocation3 [shape = 's32[2]{0}', space=sflag, size = 0x8, scoped, tag = 'scoped memory for tpu_custom_call.1']
    #allocation4 [shape = 's32[2]{0}', space=sflag, size = 0x8, scoped, tag = 'scoped memory for tpu_custom_call.1']
    #allocation5 [shape = 'u8[65536]{0}', space=vmem, size = 0x10000, scoped, tag = 'input window, operand 3, single buffered']
    #allocation6 [shape = 's32[1]{0}', space=sflag, size = 0x4, scoped, tag = 'scoped memory for tpu_custom_call.1']
    #allocation7 [shape = 'u8[8192]{0}', space=vmem, size = 0x2000, scoped, tag = 'input window, operand 4, single buffered']
    #allocation8 [shape = 'u8[8192]{0}', space=vmem, size = 0x2000, scoped, tag = 'output window, operand 0']
    %10 = vsyncpa [#allocation3], 0
    %11 = vsyncpa [#allocation6], 0
    %12 = vsyncpa [#allocation4], 0
    %s13 = scalar_lea.sflag [#allocation4], 1
    %14 = vsyncpa %s13, 0
    loop: start=0, step=1, limit=4
    $region2: #{tpu_custom_call.1} parent=1 // loop_pre_header
      _
    $region3: #{tpu_custom_call.1} parent=1 // loop_header
      %s16 = sphi 0, %s20
      %p17 = scmp.ge.s32.totalorder %s16, 4
      %s26 = sphi 0, %s28
      %s29 = sphi 0, %s26
      %s30 = sphi 0, %s29
      %s46 = sphi 0, %s30
      %s52 = sphi 0, %s54
      %s55 = sphi 0, %s52
      %s56 = sphi 0, %s55
      %s72 = sphi 0, %s56
      %s76 = sphi 0, %s76
      %s78 = sphi 0, %s76
      %s79 = sphi 0, %s78
      %s93 = sphi 0, %s79
      %s97 = sphi 0, %s97
      %s99 = sphi 0, %s97
      %s100 = sphi 0, %s99
      %s114 = sphi 0, %s100
      %s118 = sphi 0, %s118
      %s120 = sphi 0, %s118
      %s121 = sphi 0, %s120
      %s135 = sphi 0, %s121
      %s141 = sphi 0, %s143
      %s144 = sphi 0, %s141
      %s145 = sphi 0, %s144
      %s161 = sphi 0, %s145
    $region4: #{tpu_custom_call.1} parent=1 // loop_header_branch
      %19 = sbr.rel (%p17) target = $region8
    $region5: #{tpu_custom_call.1} parent=1 // loop_body
      %s21 = ssub.s32 %s16, 1
      %s22 = ssub.s32 %s16, 2
      %s23 = sadd.s32 %s16, 1
      %s24 = ssub.s32 %s16, %s23
      %p25 = scmp.eq.s32.totalorder %s24, 0
      %s27 = sadd.s32 %s26, 1
      %s28 = scalar_select %p25, %s26, %s27
      %p31 = pneg %p25
      %p32 = scmp.eq.s32.totalorder %s16, 1
      %p33 = por %p31, %p32
      %p34 = scmp.ne.s32.totalorder %s26, %s29
      %p35 = scmp.eq.s32.totalorder %s16, 0
      %p36 = por %p34, %p35
      %p37 = scmp.ne.s32.totalorder %s26, %s29
      %p38 = scmp.eq.s32.totalorder %s21, 1
      %p39 = por %p37, %p38
      %p40 = scmp.ne.s32.totalorder %s29, %s30
      %p41 = scmp.eq.s32.totalorder %s21, 0
      %p42 = por %p40, %p41
      %p43 = scmp.ne.s32.totalorder %s29, %s30
      %p44 = scmp.eq.s32.totalorder %s22, 1
      %p45 = por %p43, %p44
      %p47 = scmp.ne.s32.totalorder %s30, %s46
      %p48 = scmp.eq.s32.totalorder %s22, 0
      %p49 = por %p47, %p48
      %s50 = ssub.s32 %s16, %s23
      %p51 = scmp.eq.s32.totalorder %s50, 0
      %s53 = sadd.s32 %s52, 1
      %s54 = scalar_select %p51, %s52, %s53
      %p57 = pneg %p51
      %p58 = scmp.eq.s32.totalorder %s16, 1
      %p59 = por %p57, %p58
      %p60 = scmp.ne.s32.totalorder %s52, %s55
      %p61 = scmp.eq.s32.totalorder %s16, 0
      %p62 = por %p60, %p61
      %p63 = scmp.ne.s32.totalorder %s52, %s55
      %p64 = scmp.eq.s32.totalorder %s21, 1
      %p65 = por %p63, %p64
      %p66 = scmp.ne.s32.totalorder %s55, %s56
      %p67 = scmp.eq.s32.totalorder %s21, 0
      %p68 = por %p66, %p67
      %p69 = scmp.ne.s32.totalorder %s55, %s56
      %p70 = scmp.eq.s32.totalorder %s22, 1
      %p71 = por %p69, %p70
      %p73 = scmp.ne.s32.totalorder %s56, %s72
      %p74 = scmp.eq.s32.totalorder %s22, 0
      %p75 = por %p73, %p74
      %s77 = sadd.s32 %s76, 1
      %p80 = scmp.eq.s32.totalorder %s16, 1
      %p81 = scmp.ne.s32.totalorder %s76, %s78
      %p82 = scmp.eq.s32.totalorder %s16, 0
      %p83 = por %p81, %p82
      %p84 = scmp.ne.s32.totalorder %s76, %s78
      %p85 = scmp.eq.s32.totalorder %s21, 1
      %p86 = por %p84, %p85
      %p87 = scmp.ne.s32.totalorder %s78, %s79
      %p88 = scmp.eq.s32.totalorder %s21, 0
      %p89 = por %p87, %p88
      %p90 = scmp.ne.s32.totalorder %s78, %s79
      %p91 = scmp.eq.s32.totalorder %s22, 1
      %p92 = por %p90, %p91
      %p94 = scmp.ne.s32.totalorder %s79, %s93
      %p95 = scmp.eq.s32.totalorder %s22, 0
      %p96 = por %p94, %p95
      %s98 = sadd.s32 %s97, 1
      %p101 = scmp.eq.s32.totalorder %s16, 1
      %p102 = scmp.ne.s32.totalorder %s97, %s99
      %p103 = scmp.eq.s32.totalorder %s16, 0
      %p104 = por %p102, %p103
      %p105 = scmp.ne.s32.totalorder %s97, %s99
      %p106 = scmp.eq.s32.totalorder %s21, 1
      %p107 = por %p105, %p106
      %p108 = scmp.ne.s32.totalorder %s99, %s100
      %p109 = scmp.eq.s32.totalorder %s21, 0
      %p110 = por %p108, %p109
      %p111 = scmp.ne.s32.totalorder %s99, %s100
      %p112 = scmp.eq.s32.totalorder %s22, 1
      %p113 = por %p111, %p112
      %p115 = scmp.ne.s32.totalorder %s100, %s114
      %p116 = scmp.eq.s32.totalorder %s22, 0
      %p117 = por %p115, %p116
      %s119 = sadd.s32 %s118, 1
      %p122 = scmp.eq.s32.totalorder %s16, 1
      %p123 = scmp.ne.s32.totalorder %s118, %s120
      %p124 = scmp.eq.s32.totalorder %s16, 0
      %p125 = por %p123, %p124
      %p126 = scmp.ne.s32.totalorder %s118, %s120
      %p127 = scmp.eq.s32.totalorder %s21, 1
      %p128 = por %p126, %p127
      %p129 = scmp.ne.s32.totalorder %s120, %s121
      %p130 = scmp.eq.s32.totalorder %s21, 0
      %p131 = por %p129, %p130
      %p132 = scmp.ne.s32.totalorder %s120, %s121
      %p133 = scmp.eq.s32.totalorder %s22, 1
      %p134 = por %p132, %p133
      %p136 = scmp.ne.s32.totalorder %s121, %s135
      %p137 = scmp.eq.s32.totalorder %s22, 0
      %p138 = por %p136, %p137
      %s139 = ssub.s32 %s16, %s23
      %p140 = scmp.eq.s32.totalorder %s139, 0
      %s142 = sadd.s32 %s141, 1
      %s143 = scalar_select %p140, %s141, %s142
      %p146 = pneg %p140
      %p147 = scmp.eq.s32.totalorder %s16, 1
      %p148 = por %p146, %p147
      %p149 = scmp.ne.s32.totalorder %s141, %s144
      %p150 = scmp.eq.s32.totalorder %s16, 0
      %p151 = por %p149, %p150
      %p152 = scmp.ne.s32.totalorder %s141, %s144
      %p153 = scmp.eq.s32.totalorder %s21, 1
      %p154 = por %p152, %p153
      %p155 = scmp.ne.s32.totalorder %s144, %s145
      %p156 = scmp.eq.s32.totalorder %s21, 0
      %p157 = por %p155, %p156
      %p158 = scmp.ne.s32.totalorder %s144, %s145
      %p159 = scmp.eq.s32.totalorder %s22, 1
      %p160 = por %p158, %p159
      %p162 = scmp.ne.s32.totalorder %s145, %s161
      %p163 = scmp.eq.s32.totalorder %s22, 0
      %p164 = por %p162, %p163
      %p165 = scmp.le.s32.totalorder 1, %s16
      %p166 = scmp.lt.s32.totalorder %s16, 3
      %p167 = pnand %p165, %p166
      %p168 = pneg %p167
      // Predicated region
      $region9: #{tpu_custom_call.1} parent=5 // pred_check
        _
      $region10: #{tpu_custom_call.1} parent=5 // pred_check_branch
        %170 = sbr.rel (%p167) target = $region12
      $region11: #{tpu_custom_call.1} parent=5 // pred_region
        %s171 = ssub.s32 %s16, 1
        // Predicated region
        $region13: #{tpu_custom_call.1} parent=11 // pred_check
          %p172 = pneg %p89
        $region14: #{tpu_custom_call.1} parent=11 // pred_check_branch
          %174 = sbr.rel (%p172) target = $region16
        $region15: #{tpu_custom_call.1} parent=11 // pred_region
          %176 = vsyncadd [#allocation3], 0
          %s177 = sshll.u32 %s2, 4
          %s178 = int_to_ptr.hbm [resolvable:$true] %s177
          %s179 = sshll.u32 [#allocation2], 4
          %s180 = int_to_ptr.vmem [resolvable:$true] %s179
          %185 = dma.hbm_to_vmem [thread:$0]  %s178, 4352, %s180, [#allocation3], 64, 64, 4
        $region16: #{tpu_custom_call.1} parent=11 // pred_fallthru
          _
        // Predicated region
        $region17: #{tpu_custom_call.1} parent=11 // pred_check
          %p186 = pneg %p110
        $region18: #{tpu_custom_call.1} parent=11 // pred_check_branch
          %188 = sbr.rel (%p186) target = $region20
        $region19: #{tpu_custom_call.1} parent=11 // pred_region
          %190 = vsyncadd [#allocation6], 0
          %s191 = sshll.u32 %s3, 4
          %s192 = int_to_ptr.hbm [resolvable:$true] %s191
          %s193 = sshll.u32 [#allocation5], 4
          %s194 = int_to_ptr.vmem [resolvable:$true] %s193
          %199 = dma.hbm_to_vmem [thread:$0]  %s192, 2048, %s194, [#allocation6], 128, 128, 8
        $region20: #{tpu_custom_call.1} parent=11 // pred_fallthru
          _
        // Predicated region
        $region21: #{tpu_custom_call.1} parent=11 // pred_check
          %p200 = pneg %p131
        $region22: #{tpu_custom_call.1} parent=11 // pred_check_branch
          %202 = sbr.rel (%p200) target = $region24
        $region23: #{tpu_custom_call.1} parent=11 // pred_region
          %204 = vsyncadd [#allocation6], 0
          %s206 = sshll.u32 %s4, 4
          %s207 = int_to_ptr.hbm [resolvable:$true] %s206
          %s208 = sshll.u32 [#allocation7], 4
          %s209 = int_to_ptr.vmem [resolvable:$true] %s208
          %211 = dma.hbm_to_vmem [thread:$0]  %s207, 256, %s209, [#allocation6]
        $region24: #{tpu_custom_call.1} parent=11 // pred_fallthru
          _
      $region12: #{tpu_custom_call.1} parent=5 // pred_fallthru
        _
      %p212 = scmp.lt.s32.totalorder %s16, 2
      // Predicated region
      $region25: #{tpu_custom_call.1} parent=5 // pred_check
        %p213 = pneg %p212
      $region26: #{tpu_custom_call.1} parent=5 // pred_check_branch
        %215 = sbr.rel (%p213) target = $region28
      $region27: #{tpu_custom_call.1} parent=5 // pred_region
        // Predicated region
        $region29: #{tpu_custom_call.1} parent=27 // pred_check
          %p216 = pneg %p36
        $region30: #{tpu_custom_call.1} parent=27 // pred_check_branch
          %218 = sbr.rel (%p216) target = $region32
        $region31: #{tpu_custom_call.1} parent=27 // pred_region
          %p219 = scmp.lt.s32.totalorder %s16, 1
          %s220 = scalar_select %p219, %s16, 1
          %s221 = smul.addr %s220, 8
          %s222 = scalar_lea.vmem %s0, %s221
        $region32: #{tpu_custom_call.1} parent=27 // pred_fallthru
          _
        // Predicated region
        $region33: #{tpu_custom_call.1} parent=27 // pred_check
          %p223 = pneg %p62
        $region34: #{tpu_custom_call.1} parent=27 // pred_check_branch
          %225 = sbr.rel (%p223) target = $region36
        $region35: #{tpu_custom_call.1} parent=27 // pred_region
          %p226 = scmp.lt.s32.totalorder %s16, 1
          %s227 = scalar_select %p226, %s16, 1
          %s228 = smul.addr %s227, 8
          %s229 = scalar_lea.vmem %s1, %s228
        $region36: #{tpu_custom_call.1} parent=27 // pred_fallthru
          _
      $region28: #{tpu_custom_call.1} parent=5 // pred_fallthru
        _
      %p230 = scmp.le.s32.totalorder 1, %s16
      %p231 = scmp.lt.s32.totalorder %s16, 3
      %p232 = pnand %p230, %p231
      %p233 = pneg %p232
      // Predicated region
      $region37: #{tpu_custom_call.1} parent=5 // pred_check
        _
      $region38: #{tpu_custom_call.1} parent=5 // pred_check_branch
        %235 = sbr.rel (%p232) target = $region40
      $region39: #{tpu_custom_call.1} parent=5 // pred_region
        %s236 = ssub.s32 %s16, 1
        // Predicated region
        $region41: #{tpu_custom_call.1} parent=39 // pred_check
          %p237 = pneg %p89
        $region42: #{tpu_custom_call.1} parent=39 // pred_check_branch
          %239 = sbr.rel (%p237) target = $region44
        $region43: #{tpu_custom_call.1} parent=39 // pred_region
          %241 = dma.done [#allocation3], 4352
        $region44: #{tpu_custom_call.1} parent=39 // pred_fallthru
          _
        // Predicated region
        $region45: #{tpu_custom_call.1} parent=39 // pred_check
          %p242 = pneg %p110
        $region46: #{tpu_custom_call.1} parent=39 // pred_check_branch
          %244 = sbr.rel (%p242) target = $region48
        $region47: #{tpu_custom_call.1} parent=39 // pred_region
          %246 = dma.done [#allocation6], 2048
        $region48: #{tpu_custom_call.1} parent=39 // pred_fallthru
          _
        // Predicated region
        $region49: #{tpu_custom_call.1} parent=39 // pred_check
          %p247 = pneg %p131
        $region50: #{tpu_custom_call.1} parent=39 // pred_check_branch
          %249 = sbr.rel (%p247) target = $region52
        $region51: #{tpu_custom_call.1} parent=39 // pred_region
          %251 = dma.done [#allocation6], 256
        $region52: #{tpu_custom_call.1} parent=39 // pred_fallthru
          _
        %p252 = scmp.lt.s32.totalorder %s21, 1
        %s253 = scalar_select %p252, %s21, 1
        %s254 = smul.addr %s253, 8
        %s255 = scalar_lea.vmem %s0, %s254
        %p256 = pneg %p42
        %p257 = pneg %p39
        %p258 = scmp.lt.s32.totalorder %s21, 1
        %s259 = scalar_select %p258, %s21, 1
        %s260 = smul.addr %s259, 8
        %s261 = scalar_lea.vmem %s1, %s260
        %p262 = pneg %p68
        %p263 = pneg %p65
        %p264 = pneg %p89
        %p265 = pneg %p86
        %p266 = pneg %p110
        %p267 = pneg %p107
        %p268 = pneg %p131
        %p269 = pneg %p128
        %p270 = pneg %p157
        %p271 = pneg %p154
        %s272 = sand.u32 %s144, 1
        %s273 = scalar_lea.sflag [#allocation4], %s272
        %s274 = sand.u32 %s144, 1
        %s275 = smul.addr %s274, 8
        %s276 = scalar_lea.vmem [#allocation8], %s275
        %p277 = scmp.lt.s32.totalorder %s21, 1
        %s278 = scalar_select %p277, %s21, 1
        %s279 = smul.addr %s278, 8
        %s280 = scalar_lea.vmem %s0, %s279
        %p281 = scmp.lt.s32.totalorder %s21, 1
        %s282 = scalar_select %p281, %s21, 1
        %s283 = smul.addr %s282, 8
        %s284 = scalar_lea.vmem %s1, %s283
        %v286 = vld [vmem:[%s280] sm:$0xff]
        %v287 = vld [vmem:[%s284] sm:$0xff]
        %v288 = vld [vmem:[#allocation2] sm:$0xf]
        %v289 = vld [vmem:[#allocation2 + $0x4] sm:$0xf]
        %v290 = vld [vmem:[#allocation2 + $0x8] sm:$0xf]
        %v291 = vld [vmem:[#allocation2 + $0xc] sm:$0xf]
        %v292 = vld [vmem:[#allocation2 + $0x10] sm:$0xf]
        %v293 = vld [vmem:[#allocation2 + $0x14] sm:$0xf]
        %v294 = vld [vmem:[#allocation2 + $0x18] sm:$0xf]
        %v295 = vld [vmem:[#allocation2 + $0x1c] sm:$0xf]
        %v296 = vld [vmem:[#allocation2 + $0x20] sm:$0xf]
        %v297 = vld [vmem:[#allocation2 + $0x24] sm:$0xf]
        %v298 = vld [vmem:[#allocation2 + $0x28] sm:$0xf]
        %v299 = vld [vmem:[#allocation2 + $0x2c] sm:$0xf]
        %v300 = vld [vmem:[#allocation2 + $0x30] sm:$0xf]
        %v301 = vld [vmem:[#allocation2 + $0x34] sm:$0xf]
        %v302 = vld [vmem:[#allocation2 + $0x38] sm:$0xf]
        %v303 = vld [vmem:[#allocation2 + $0x3c] sm:$0xf]
        %v304 = vld [vmem:[#allocation2 + $0x40] sm:$0xf]
        %v305 = vld [vmem:[#allocation2 + $0x44] sm:$0xf]
        %v306 = vld [vmem:[#allocation2 + $0x48] sm:$0xf]
        %v307 = vld [vmem:[#allocation2 + $0x4c] sm:$0xf]
        %v308 = vld [vmem:[#allocation2 + $0x50] sm:$0xf]
        %v309 = vld [vmem:[#allocation2 + $0x54] sm:$0xf]
        %v310 = vld [vmem:[#allocation2 + $0x58] sm:$0xf]
        %v311 = vld [vmem:[#allocation2 + $0x5c] sm:$0xf]
        %v312 = vld [vmem:[#allocation2 + $0x60] sm:$0xf]
        %v313 = vld [vmem:[#allocation2 + $0x64] sm:$0xf]
        %v314 = vld [vmem:[#allocation2 + $0x68] sm:$0xf]
        %v315 = vld [vmem:[#allocation2 + $0x6c] sm:$0xf]
        %v316 = vld [vmem:[#allocation2 + $0x70] sm:$0xf]
        %v317 = vld [vmem:[#allocation2 + $0x74] sm:$0xf]
        %v318 = vld [vmem:[#allocation2 + $0x78] sm:$0xf]
        %v319 = vld [vmem:[#allocation2 + $0x7c] sm:$0xf]
        %v320 = vld [vmem:[#allocation2 + $0x80] sm:$0xf]
        %v321 = vld [vmem:[#allocation2 + $0x84] sm:$0xf]
        %v322 = vld [vmem:[#allocation2 + $0x88] sm:$0xf]
        %v323 = vld [vmem:[#allocation2 + $0x8c] sm:$0xf]
        %v324 = vld [vmem:[#allocation2 + $0x90] sm:$0xf]
        %v325 = vld [vmem:[#allocation2 + $0x94] sm:$0xf]
        %v326 = vld [vmem:[#allocation2 + $0x98] sm:$0xf]
        %v327 = vld [vmem:[#allocation2 + $0x9c] sm:$0xf]
        %v328 = vld [vmem:[#allocation2 + $0xa0] sm:$0xf]
        %v329 = vld [vmem:[#allocation2 + $0xa4] sm:$0xf]
        %v330 = vld [vmem:[#allocation2 + $0xa8] sm:$0xf]
        %v331 = vld [vmem:[#allocation2 + $0xac] sm:$0xf]
        %v332 = vld [vmem:[#allocation2 + $0xb0] sm:$0xf]
        %v333 = vld [vmem:[#allocation2 + $0xb4] sm:$0xf]
        %v334 = vld [vmem:[#allocation2 + $0xb8] sm:$0xf]
        %v335 = vld [vmem:[#allocation2 + $0xbc] sm:$0xf]
        %v336 = vld [vmem:[#allocation2 + $0xc0] sm:$0xf]
        %v337 = vld [vmem:[#allocation2 + $0xc4] sm:$0xf]
        %v338 = vld [vmem:[#allocation2 + $0xc8] sm:$0xf]
        %v339 = vld [vmem:[#allocation2 + $0xcc] sm:$0xf]
        %v340 = vld [vmem:[#allocation2 + $0xd0] sm:$0xf]
        %v341 = vld [vmem:[#allocation2 + $0xd4] sm:$0xf]
        %v342 = vld [vmem:[#allocation2 + $0xd8] sm:$0xf]
        %v343 = vld [vmem:[#allocation2 + $0xdc] sm:$0xf]
        %v344 = vld [vmem:[#allocation2 + $0xe0] sm:$0xf]
        %v345 = vld [vmem:[#allocation2 + $0xe4] sm:$0xf]
        %v346 = vld [vmem:[#allocation2 + $0xe8] sm:$0xf]
        %v347 = vld [vmem:[#allocation2 + $0xec] sm:$0xf]
        %v348 = vld [vmem:[#allocation2 + $0xf0] sm:$0xf]
        %v349 = vld [vmem:[#allocation2 + $0xf4] sm:$0xf]
        %v350 = vld [vmem:[#allocation2 + $0xf8] sm:$0xf]
        %v351 = vld [vmem:[#allocation2 + $0xfc] sm:$0xf]
        %v352 = vld [vmem:[#allocation2 + $0x100] sm:$0xf]
        %v353 = vld [vmem:[#allocation2 + $0x104] sm:$0xf]
        %v354 = vld [vmem:[#allocation2 + $0x108] sm:$0xf]
        %v355 = vld [vmem:[#allocation2 + $0x10c] sm:$0xf]
        %v356 = vld [vmem:[#allocation5] sm:$0xff]
        %v357 = vld [vmem:[#allocation5 + $0x8] sm:$0xff]
        %v358 = vld [vmem:[#allocation5 + $0x10] sm:$0xff]
        %v359 = vld [vmem:[#allocation5 + $0x18] sm:$0xff]
        %v360 = vld [vmem:[#allocation5 + $0x20] sm:$0xff]
        %v361 = vld [vmem:[#allocation5 + $0x28] sm:$0xff]
        %v362 = vld [vmem:[#allocation5 + $0x30] sm:$0xff]
        %v363 = vld [vmem:[#allocation5 + $0x38] sm:$0xff]
        %v364 = vld [vmem:[#allocation5 + $0x40] sm:$0xff]
        %v365 = vld [vmem:[#allocation5 + $0x48] sm:$0xff]
        %v366 = vld [vmem:[#allocation5 + $0x50] sm:$0xff]
        %v367 = vld [vmem:[#allocation5 + $0x58] sm:$0xff]
        %v368 = vld [vmem:[#allocation5 + $0x60] sm:$0xff]
        %v369 = vld [vmem:[#allocation5 + $0x68] sm:$0xff]
        %v370 = vld [vmem:[#allocation5 + $0x70] sm:$0xff]
        %v371 = vld [vmem:[#allocation5 + $0x78] sm:$0xff]
        %v372 = vld [vmem:[#allocation7] ss:$0 sm:$0xff]
        %v373 = vld [vmem:[#allocation7 + $0x1] ss:$0 sm:$0xff]
        %v374 = vld [vmem:[#allocation7 + $0x2] ss:$0 sm:$0xff]
        %v375 = vld [vmem:[#allocation7 + $0x3] ss:$0 sm:$0xff]
        %s376 = scalar_lea.vmem [#allocation7], 4
        %v377 = vld [vmem:[%s376] ss:$8 sm:$0x3]
        %v378 = vld [vmem:[#allocation7 + $0x5] ss:$0 sm:$0xff]
        %v379 = vpack.c.bf16 %v286, %v286
        %v384 = vunpack.c.l.b16 %v288
        %v385 = vunpack.c.l.b16 %v289
        %v386 = vunpack.c.l.b16 %v290
        %v387 = vunpack.c.l.b16 %v291
        %v388 = vpack.c.b16 %v385, %v384
        %v389 = vpack.c.b16 %v387, %v386
        %vm392 = vcmask 261120
        %v394 = vsel %vm392, %v379, 0
        %396 = vmatpush.bf16.msra.mxu0 0
        %397 = vmatpush.bf16.msra.mxu0 0
        %398 = vmatpush.bf16.msra.mxu0 0
        %399 = vmatpush.bf16.msra.mxu0 0
        %400 = vmatpush.bf16.msra.mxu0 0
        %401 = vmatpush.bf16.msra.mxu0 0
        %402 = vmatpush.bf16.msra.mxu0 %v389
        %403 = vmatpush.bf16.msra.mxu0 %v388
        %404 = vmatmul.bf16.gmra.mxu0 %v394
        %v405 = vpop.f32.mrf.mxu0
        %v406 = vadd.f32 %v372, %v405
        %v407 = vpop.f32.mrf.mxu0
        %408 = vdwg.mxu0
        %v409 = vmax.f32 %v406, 0.0
        %411 = vset.pattern.permute.xlu0 0
        %412 = vperm.xlu0 %411, %v287
        %v413 = vpop.permute.xlu0 %412
        %v415 = vmul.f32 %v413, %v373
        %v416 = vadd.f32 %v415, %v374
        %v417 = vmax.f32 %v416, 0.0
        %v418 = vpack.c.bf16 %v409, %v409
        %v419 = vpack.c.bf16 %v417, %v417
        %v452 = vunpack.c.l.b16 %v292
        %v453 = vunpack.c.l.b16 %v293
        %v454 = vunpack.c.l.b16 %v294
        %v455 = vunpack.c.l.b16 %v295
        %v456 = vunpack.c.l.b16 %v296
        %v457 = vunpack.c.l.b16 %v297
        %v458 = vunpack.c.l.b16 %v298
        %v459 = vunpack.c.l.b16 %v299
        %v460 = vunpack.c.l.b16 %v300
        %v461 = vunpack.c.l.b16 %v301
        %v462 = vunpack.c.l.b16 %v302
        %v463 = vunpack.c.l.b16 %v303
        %v464 = vunpack.c.l.b16 %v304
        %v465 = vunpack.c.l.b16 %v305
        %v466 = vunpack.c.l.b16 %v306
        %v467 = vunpack.c.l.b16 %v307
        %v468 = vunpack.c.l.b16 %v308
        %v469 = vunpack.c.l.b16 %v309
        %v470 = vunpack.c.l.b16 %v310
        %v471 = vunpack.c.l.b16 %v311
        %v472 = vunpack.c.l.b16 %v312
        %v473 = vunpack.c.l.b16 %v313
        %v474 = vunpack.c.l.b16 %v314
        %v475 = vunpack.c.l.b16 %v315
        %v476 = vunpack.c.l.b16 %v316
        %v477 = vunpack.c.l.b16 %v317
        %v478 = vunpack.c.l.b16 %v318
        %v479 = vunpack.c.l.b16 %v319
        %v480 = vunpack.c.l.b16 %v320
        %v481 = vunpack.c.l.b16 %v321
        %v482 = vunpack.c.l.b16 %v322
        %v483 = vunpack.c.l.b16 %v323
        %v484 = vpack.c.b16 %v453, %v452
        %v485 = vpack.c.b16 %v455, %v454
        %v486 = vpack.c.b16 %v457, %v456
        %v487 = vpack.c.b16 %v459, %v458
        %v488 = vpack.c.b16 %v461, %v460
        %v489 = vpack.c.b16 %v463, %v462
        %v490 = vpack.c.b16 %v465, %v464
        %v491 = vpack.c.b16 %v467, %v466
        %v492 = vpack.c.b16 %v469, %v468
        %v493 = vpack.c.b16 %v471, %v470
        %v494 = vpack.c.b16 %v473, %v472
        %v495 = vpack.c.b16 %v475, %v474
        %v496 = vpack.c.b16 %v477, %v476
        %v497 = vpack.c.b16 %v479, %v478
        %v498 = vpack.c.b16 %v481, %v480
        %v499 = vpack.c.b16 %v483, %v482
        %516 = vmatpush.bf16.msra.mxu0 %v491
        %517 = vmatpush.bf16.msra.mxu0 %v490
        %518 = vmatpush.bf16.msra.mxu0 %v489
        %519 = vmatpush.bf16.msra.mxu0 %v488
        %520 = vmatpush.bf16.msra.mxu0 %v487
        %521 = vmatpush.bf16.msra.mxu0 %v486
        %522 = vmatpush.bf16.msra.mxu0 %v485
        %523 = vmatpush.bf16.msra.mxu0 %v484
        %524 = vmatmul.bf16.gmra.mxu0 %v418
        %v525 = vpop.f32.mrf.mxu0
        %v526 = vadd.f32 %v375, %v525
        %v527 = vpop.f32.mrf.mxu0
        %528 = vdwg.mxu0
        %529 = vmatpush.bf16.msra.mxu0 %v499
        %530 = vmatpush.bf16.msra.mxu0 %v498
        %531 = vmatpush.bf16.msra.mxu0 %v497
        %532 = vmatpush.bf16.msra.mxu0 %v496
        %533 = vmatpush.bf16.msra.mxu0 %v495
        %534 = vmatpush.bf16.msra.mxu0 %v494
        %535 = vmatpush.bf16.msra.mxu0 %v493
        %536 = vmatpush.bf16.msra.mxu0 %v492
        %537 = vmatmul.bf16.gmra.mxu0 %v419
        %v538 = vpop.f32.mrf.mxu0
        %v539 = vadd.f32 %v526, %v538
        %v540 = vpop.f32.mrf.mxu0
        %541 = vdwg.mxu0
        %v542 = vpack.c.bf16 %v539, %v539
        %v544 = vperm.slane %v377, 0
        %v545 = vperm.slane %v377, 1
        %v564 = vunpack.c.l.b16 %v356
        %v565 = vunpack.c.h.b16 %v356
        %v566 = vunpack.c.l.b16 %v357
        %v567 = vunpack.c.h.b16 %v357
        %v568 = vunpack.c.l.b16 %v358
        %v569 = vunpack.c.h.b16 %v358
        %v570 = vunpack.c.l.b16 %v359
        %v571 = vunpack.c.h.b16 %v359
        %v572 = vunpack.c.l.b16 %v360
        %v573 = vunpack.c.h.b16 %v360
        %v574 = vunpack.c.l.b16 %v361
        %v575 = vunpack.c.h.b16 %v361
        %v576 = vunpack.c.l.b16 %v362
        %v577 = vunpack.c.h.b16 %v362
        %v578 = vunpack.c.l.b16 %v363
        %v579 = vunpack.c.h.b16 %v363
        %v580 = vunpack.c.l.b16 %v364
        %v581 = vunpack.c.h.b16 %v364
        %v582 = vunpack.c.l.b16 %v365
        %v583 = vunpack.c.h.b16 %v365
        %v584 = vunpack.c.l.b16 %v366
        %v585 = vunpack.c.h.b16 %v366
        %v586 = vunpack.c.l.b16 %v367
        %v587 = vunpack.c.h.b16 %v367
        %v588 = vunpack.c.l.b16 %v368
        %v589 = vunpack.c.h.b16 %v368
        %v590 = vunpack.c.l.b16 %v369
        %v591 = vunpack.c.h.b16 %v369
        %v592 = vunpack.c.l.b16 %v370
        %v593 = vunpack.c.h.b16 %v370
        %v594 = vunpack.c.l.b16 %v371
        %v595 = vunpack.c.h.b16 %v371
        %v596 = vpack.c.b16 %v566, %v564
        %v597 = vpack.c.b16 %v567, %v565
        %v598 = vpack.c.b16 %v570, %v568
        %v599 = vpack.c.b16 %v571, %v569
        %v600 = vpack.c.b16 %v574, %v572
        %v601 = vpack.c.b16 %v575, %v573
        %v602 = vpack.c.b16 %v578, %v576
        %v603 = vpack.c.b16 %v579, %v577
        %v604 = vpack.c.b16 %v582, %v580
        %v605 = vpack.c.b16 %v583, %v581
        %v606 = vpack.c.b16 %v586, %v584
        %v607 = vpack.c.b16 %v587, %v585
        %v608 = vpack.c.b16 %v590, %v588
        %v609 = vpack.c.b16 %v591, %v589
        %v610 = vpack.c.b16 %v594, %v592
        %v611 = vpack.c.b16 %v595, %v593
        %628 = vmatpush.bf16.msra.mxu0 %v610
        %629 = vmatpush.bf16.msra.mxu0 %v608
        %630 = vmatpush.bf16.msra.mxu0 %v606
        %631 = vmatpush.bf16.msra.mxu0 %v604
        %632 = vmatpush.bf16.msra.mxu0 %v602
        %633 = vmatpush.bf16.msra.mxu0 %v600
        %634 = vmatpush.bf16.msra.mxu0 %v598
        %635 = vmatpush.bf16.msra.mxu0 %v596
        %636 = vmatmul.bf16.gmra.mxu0 %v542
        %v637 = vpop.f32.mrf.mxu0
        %v638 = vadd.f32 %v544, %v637
        %v639 = vpop.f32.mrf.mxu0
        %640 = vdwg.mxu0
        %641 = vmatpush.bf16.msra.mxu0 %v611
        %642 = vmatpush.bf16.msra.mxu0 %v609
        %643 = vmatpush.bf16.msra.mxu0 %v607
        %644 = vmatpush.bf16.msra.mxu0 %v605
        %645 = vmatpush.bf16.msra.mxu0 %v603
        %646 = vmatpush.bf16.msra.mxu0 %v601
        %647 = vmatpush.bf16.msra.mxu0 %v599
        %648 = vmatpush.bf16.msra.mxu0 %v597
        %649 = vmatmul.bf16.gmra.mxu0 %v542
        %v650 = vpop.f32.mrf.mxu0
        %v651 = vadd.f32 %v545, %v650
        %v652 = vpop.f32.mrf.mxu0
        %653 = vdwg.mxu0
        %v654 = vmax.f32 %v638, 0.0
        %v655 = vmax.f32 %v651, 0.0
        %v656 = vpack.c.bf16 %v654, %v654
        %v657 = vpack.c.bf16 %v655, %v655
        %v690 = vunpack.c.l.b16 %v324
        %v691 = vunpack.c.l.b16 %v325
        %v692 = vunpack.c.l.b16 %v326
        %v693 = vunpack.c.l.b16 %v327
        %v694 = vunpack.c.l.b16 %v328
        %v695 = vunpack.c.l.b16 %v329
        %v696 = vunpack.c.l.b16 %v330
        %v697 = vunpack.c.l.b16 %v331
        %v698 = vunpack.c.l.b16 %v332
        %v699 = vunpack.c.l.b16 %v333
        %v700 = vunpack.c.l.b16 %v334
        %v701 = vunpack.c.l.b16 %v335
        %v702 = vunpack.c.l.b16 %v336
        %v703 = vunpack.c.l.b16 %v337
        %v704 = vunpack.c.l.b16 %v338
        %v705 = vunpack.c.l.b16 %v339
        %v706 = vunpack.c.l.b16 %v340
        %v707 = vunpack.c.l.b16 %v341
        %v708 = vunpack.c.l.b16 %v342
        %v709 = vunpack.c.l.b16 %v343
        %v710 = vunpack.c.l.b16 %v344
        %v711 = vunpack.c.l.b16 %v345
        %v712 = vunpack.c.l.b16 %v346
        %v713 = vunpack.c.l.b16 %v347
        %v714 = vunpack.c.l.b16 %v348
        %v715 = vunpack.c.l.b16 %v349
        %v716 = vunpack.c.l.b16 %v350
        %v717 = vunpack.c.l.b16 %v351
        %v718 = vunpack.c.l.b16 %v352
        %v719 = vunpack.c.l.b16 %v353
        %v720 = vunpack.c.l.b16 %v354
        %v721 = vunpack.c.l.b16 %v355
        %v722 = vpack.c.b16 %v691, %v690
        %v723 = vpack.c.b16 %v693, %v692
        %v724 = vpack.c.b16 %v695, %v694
        %v725 = vpack.c.b16 %v697, %v696
        %v726 = vpack.c.b16 %v699, %v698
        %v727 = vpack.c.b16 %v701, %v700
        %v728 = vpack.c.b16 %v703, %v702
        %v729 = vpack.c.b16 %v705, %v704
        %v730 = vpack.c.b16 %v707, %v706
        %v731 = vpack.c.b16 %v709, %v708
        %v732 = vpack.c.b16 %v711, %v710
        %v733 = vpack.c.b16 %v713, %v712
        %v734 = vpack.c.b16 %v715, %v714
        %v735 = vpack.c.b16 %v717, %v716
        %v736 = vpack.c.b16 %v719, %v718
        %v737 = vpack.c.b16 %v721, %v720
        %754 = vmatpush.bf16.msra.mxu0 %v729
        %755 = vmatpush.bf16.msra.mxu0 %v728
        %756 = vmatpush.bf16.msra.mxu0 %v727
        %757 = vmatpush.bf16.msra.mxu0 %v726
        %758 = vmatpush.bf16.msra.mxu0 %v725
        %759 = vmatpush.bf16.msra.mxu0 %v724
        %760 = vmatpush.bf16.msra.mxu0 %v723
        %761 = vmatpush.bf16.msra.mxu0 %v722
        %762 = vmatmul.bf16.gmra.mxu0 %v656
        %v763 = vpop.f32.mrf.mxu0
        %v764 = vadd.f32 %v378, %v763
        %v765 = vpop.f32.mrf.mxu0
        %766 = vdwg.mxu0
        %767 = vmatpush.bf16.msra.mxu0 %v737
        %768 = vmatpush.bf16.msra.mxu0 %v736
        %769 = vmatpush.bf16.msra.mxu0 %v735
        %770 = vmatpush.bf16.msra.mxu0 %v734
        %771 = vmatpush.bf16.msra.mxu0 %v733
        %772 = vmatpush.bf16.msra.mxu0 %v732
        %773 = vmatpush.bf16.msra.mxu0 %v731
        %774 = vmatpush.bf16.msra.mxu0 %v730
        %775 = vmatmul.bf16.gmra.mxu0 %v657
        %v776 = vpop.f32.mrf.mxu0
        %v777 = vadd.f32 %v764, %v776
        %v778 = vpop.f32.mrf.mxu0
        %779 = vdwg.mxu0
        %780 = vst [vmem:[%s276] sm:$0xff] %v777
        %s781 = sand.u32 %s144, 1
        %s782 = scalar_lea.sflag [#allocation4], %s781
        %s783 = sand.u32 %s144, 1
        %s784 = smul.addr %s783, 8
        %s785 = scalar_lea.vmem [#allocation8], %s784
        // Predicated region
        $region53: #{tpu_custom_call.1} parent=39 // pred_check
          %p786 = pneg %p154
        $region54: #{tpu_custom_call.1} parent=39 // pred_check_branch
          %788 = sbr.rel (%p786) target = $region56
        $region55: #{tpu_custom_call.1} parent=39 // pred_region
          %790 = vsyncadd %s782, 0
          %s791 = smul.addr %s21, 8
          %s792 = scalar_lea.hbm %s5, %s791
          %s794 = sshll.u32 %s785, 4
          %s795 = int_to_ptr.vmem [resolvable:$true] %s794
          %s796 = sshll.u32 %s792, 4
          %s797 = int_to_ptr.hbm [resolvable:$true] %s796
          %799 = dma.vmem_to_hbm [thread:$0]  %s795, 128, %s797, %s782
        $region56: #{tpu_custom_call.1} parent=39 // pred_fallthru
          _
      $region40: #{tpu_custom_call.1} parent=5 // pred_fallthru
        _
      %p800 = scmp.le.s32.totalorder 2, %s16
      // Predicated region
      $region57: #{tpu_custom_call.1} parent=5 // pred_check
        %p801 = pneg %p800
      $region58: #{tpu_custom_call.1} parent=5 // pred_check_branch
        %803 = sbr.rel (%p801) target = $region60
      $region59: #{tpu_custom_call.1} parent=5 // pred_region
        %s804 = ssub.s32 %s16, 2
        // Predicated region
        $region61: #{tpu_custom_call.1} parent=59 // pred_check
          %p805 = pneg %p160
        $region62: #{tpu_custom_call.1} parent=59 // pred_check_branch
          %807 = sbr.rel (%p805) target = $region64
        $region63: #{tpu_custom_call.1} parent=59 // pred_region
          %s808 = sand.u32 %s145, 1
          %s809 = scalar_lea.sflag [#allocation4], %s808
          %s810 = sand.u32 %s145, 1
          %s811 = smul.addr %s810, 8
          %s812 = scalar_lea.vmem [#allocation8], %s811
          %814 = dma.done %s809, 128
        $region64: #{tpu_custom_call.1} parent=59 // pred_fallthru
          _
      $region60: #{tpu_custom_call.1} parent=5 // pred_fallthru
        _
    $region6: #{tpu_custom_call.1} parent=1 // loop_footer
      %s20 = sadd.s32 1, %s16
    $region7: #{tpu_custom_call.1} parent=1 // loop_footer_branch
      %15 = sbr.rel target = $region3
    $region8: #{tpu_custom_call.1} parent=1 // loop_exit
      _
    %815 = vsyncpa [#allocation3], 1
    %s816 = scalar_lea.sflag [#allocation3], 1
    %817 = vsyncpa %s816, 1
    %818 = vsyncpa [#allocation6], 1
    %819 = vsyncpa [#allocation4], 1
    %s820 = scalar_lea.sflag [#allocation4], 1
    %821 = vsyncpa %s820, 1

</llo_original>
